<compile_context>
chip_gen: v6e
topology: v6e:2x2x1
jax: 0.10.0
libtpu: 0.0.40
codegen_flags: <defaults>
</compile_context>

<pallas_src>
import functools

import jax
import jax.numpy as jnp
from jax.experimental import pallas as pl
from jax.experimental.pallas import tpu as pltpu

_LANES = 128
_SUBLANES = 8


def _f1_kernel(yp_ref, yt_ref, out_ref,
               acc_tp1, acc_tp0, acc_fp1, acc_fn1,
               *, epsilon: float, n_valid: int):
    pid = pl.program_id(0)

    @pl.when(pid == 0)
    def _init():
        acc_tp1[...] = jnp.zeros_like(acc_tp1)
        acc_tp0[...] = jnp.zeros_like(acc_tp0)
        acc_fp1[...] = jnp.zeros_like(acc_fp1)
        acc_fn1[...] = jnp.zeros_like(acc_fn1)

    # Lane-dense tiles: batch fills (tr, 128); class axis is the tiny leading dim.
    x0 = yp_ref[0].astype(jnp.float32)        # (tr, 128) class-0 logits
    x1 = yp_ref[1].astype(jnp.float32)        # (tr, 128) class-1 logits
    y = yt_ref[...].astype(jnp.float32)       # (tr, 128) labels in {0, 1}
    tr, lanes = y.shape

    # 2-class softmax == sigmoid(x1 - x0), numerically stable form.
    d = x1 - x0
    z = jnp.exp(-jnp.abs(d))
    inv = 1.0 / (1.0 + z)
    p1 = jnp.where(d >= 0, inv, z * inv)      # softmax prob of class 1; p0 = 1 - p1

    # Validity mask for the zero-padded tail (derived from iota, no extra input).
    row = jax.lax.broadcasted_iota(jnp.int32, (tr, lanes), 0)
    lane = jax.lax.broadcasted_iota(jnp.int32, (tr, lanes), 1)
    gidx = (pid * tr + row) * lanes + lane
    m = (gidx < n_valid).astype(jnp.float32)

    ym = m * y            # masked one-hot indicator of class 1
    nym = m - ym          # masked one-hot indicator of class 0

    c_tp1 = ym * p1       # y1 * p1
    c_fn1 = ym - c_tp1    # y1 * (1 - p1)   (== fp of class 0)
    c_fp1 = nym * p1      # y0 * p1         (== fn of class 0)
    c_tp0 = nym - c_fp1   # y0 * (1 - p1)

    # Fold (tr, 128) -> (8, 128): pure VALU adds, accumulation stays lane-dense.
    def fold(x):
        if tr == _SUBLANES:
            return x
        return x.reshape(tr // _SUBLANES, _SUBLANES, lanes).sum(axis=0)

    acc_tp1[...] += fold(c_tp1)
    acc_tp0[...] += fold(c_tp0)
    acc_fp1[...] += fold(c_fp1)
    acc_fn1[...] += fold(c_fn1)

    @pl.when(pid == pl.num_programs(0) - 1)
    def _finalize():
        def total(acc):                                   # (8,128) -> (1,1)
            s = jnp.sum(acc[...], axis=1, keepdims=True)  # lane reduce
            return jnp.sum(s, axis=0, keepdims=True)      # sublane reduce

        tp1 = total(acc_tp1)
        tp0 = total(acc_tp0)
        fp1 = total(acc_fp1)
        fn1 = total(acc_fn1)
        fp0 = fn1        # sum(y1 * p0)
        fn0 = fp1        # sum(y0 * p1)

        prec1 = tp1 / (tp1 + fp1 + epsilon)
        rec1 = tp1 / (tp1 + fn1 + epsilon)
        prec0 = tp0 / (tp0 + fp0 + epsilon)
        rec0 = tp0 / (tp0 + fn0 + epsilon)

        f1_1 = 2.0 * (prec1 * rec1) / (prec1 + rec1 + epsilon)
        f1_0 = 2.0 * (prec0 * rec0) / (prec0 + rec0 + epsilon)
        f1_1 = jnp.clip(f1_1, epsilon, 1.0 - epsilon)
        f1_0 = jnp.clip(f1_0, epsilon, 1.0 - epsilon)

        out_ref[...] = 1.0 - 0.5 * (f1_0 + f1_1)          # (1, 1) f32


def f1_score(y_pred: jax.Array, y_true: jax.Array,
             epsilon: float = 1e-7, block_rows: int = 512) -> jax.Array:
    """Pallas equivalent of F1Score.forward. Returns a scalar f32."""
    assert y_pred.ndim == 2 and y_pred.shape[1] == 2, "module one-hots into 2 classes"
    assert y_true.ndim == 1 and y_true.shape[0] == y_pred.shape[0]
    n = y_pred.shape[0]

    # Lane-dense tiling of the batch axis.
    rows = pl.cdiv(n, _LANES)
    rows8 = pl.cdiv(rows, _SUBLANES) * _SUBLANES
    tr = max(_SUBLANES, (min(block_rows, rows8) // _SUBLANES) * _SUBLANES)
    rows_p = pl.cdiv(rows8, tr) * tr
    n_pad = rows_p * _LANES
    num_tiles = rows_p // tr

    # Layout plumbing only (no dtype cast; kernel casts per tile).
    yp = jnp.transpose(y_pred)                       # (2, n)
    yp = jnp.pad(yp, ((0, 0), (0, n_pad - n)))
    yp = yp.reshape(2, rows_p, _LANES)

    yt = jnp.pad(y_true.astype(jnp.int32), (0, n_pad - n))
    yt = yt.reshape(rows_p, _LANES)

    out = pl.pallas_call(
        functools.partial(_f1_kernel, epsilon=epsilon, n_valid=n),
        out_shape=jax.ShapeDtypeStruct((1, 1), jnp.float32),
        grid=(num_tiles,),
        in_specs=[
            pl.BlockSpec((2, tr, _LANES), lambda i: (0, i, 0)),
            pl.BlockSpec((tr, _LANES), lambda i: (i, 0)),
        ],
        out_specs=pl.BlockSpec((1, 1), lambda i: (0, 0)),
        scratch_shapes=[
            pltpu.VMEM((_SUBLANES, _LANES), jnp.float32),
            pltpu.VMEM((_SUBLANES, _LANES), jnp.float32),
            pltpu.VMEM((_SUBLANES, _LANES), jnp.float32),
            pltpu.VMEM((_SUBLANES, _LANES), jnp.float32),
        ],
        compiler_params=pltpu.CompilerParams(
            # Single grid axis carries the tp/fp/fn accumulators -> reduction axis.
            dimension_semantics=("arbitrary",),
        ),
    )(yp, yt)
    return out[0, 0]


def _f1_score_ref(y_pred, y_true, epsilon=1e-7):
    """Pure-JAX reference mirroring the PyTorch module."""
    y_true_oh = jax.nn.one_hot(y_true, 2, dtype=jnp.float32)
    y_pred_sm = jax.nn.softmax(y_pred.astype(jnp.float32), axis=1)
    tp = jnp.sum(y_true_oh * y_pred_sm, axis=0)
    fp = jnp.sum((1 - y_true_oh) * y_pred_sm, axis=0)
    fn = jnp.sum(y_true_oh * (1 - y_pred_sm), axis=0)
    precision = tp / (tp + fp + epsilon)
    recall = tp / (tp + fn + epsilon)
    f1 = 2 * (precision * recall) / (precision + recall + epsilon)
    f1 = jnp.clip(f1, epsilon, 1 - epsilon)
    return 1 - jnp.mean(f1)


if __name__ == "__main__":
    key = jax.random.PRNGKey(0)
    k_pred, k_true = jax.random.split(key)

    N, C = 8, 2  # module fixes C=2 via F.one_hot(y_true, 2)
    y_pred = jax.random.normal(k_pred, (N, C), dtype=jnp.float32)
    y_true = jax.random.randint(k_true, (N,), 0, C, dtype=jnp.int32)

    loss = jax.block_until_ready(f1_score(y_pred, y_true))
    ref = jax.block_until_ready(_f1_score_ref(y_pred, y_true))
    assert jnp.allclose(loss, ref, atol=1e-5, rtol=1e-5), (loss, ref)

    # Exercise the multi-tile accumulator path and the padded-tail mask.
    k2p, k2t = jax.random.split(jax.random.PRNGKey(1))
    N2 = 2500
    y_pred2 = jax.random.normal(k2p, (N2, C), dtype=jnp.float32)
    y_true2 = jax.random.randint(k2t, (N2,), 0, C, dtype=jnp.int32)
    loss2 = jax.block_until_ready(f1_score(y_pred2, y_true2, block_rows=8))
    ref2 = jax.block_until_ready(_f1_score_ref(y_pred2, y_true2))
    assert jnp.allclose(loss2, ref2, atol=1e-4, rtol=1e-4), (loss2, ref2)

    print("KERNEL_OK")
</pallas_src>

<mosaic_0001>
module attributes {stable_mosaic.version = 11 : i64} {
  func.func @_f1_kernel(%arg0: i32, %arg1: memref<2x8x128xf32, #tpu.memory_space<vmem>>, %arg2: memref<8x128xi32, #tpu.memory_space<vmem>>, %arg3: memref<1x1xf32, #tpu.memory_space<vmem>>, %arg4: memref<8x128xf32, #tpu.memory_space<vmem>>, %arg5: memref<8x128xf32, #tpu.memory_space<vmem>>, %arg6: memref<8x128xf32, #tpu.memory_space<vmem>>, %arg7: memref<8x128xf32, #tpu.memory_space<vmem>>) attributes {dimension_semantics = [#tpu.dimension_semantics<arbitrary>], iteration_bounds = array<i64: 1>, scalar_prefetch = 0 : i64, scratch_operands = 4 : i64, tpu.core_type = #tpu.core_type<tc>, window_params = [{transform_indices = @transform_0, window_bounds = array<i64: 2, 8, 128>}, {transform_indices = @transform_1, window_bounds = array<i64: 8, 128>}, {pipeline_mode = #tpu.pipeline_mode<synchronous>, transform_indices = @transform_2, window_bounds = array<i64: 1, 1>}]} {
    %c0_i32 = arith.constant 0 : i32
    %0 = arith.cmpi eq, %arg0, %c0_i32 : i32
    %1 = arith.extui %0 : i1 to i32
    %c0_i32_0 = arith.constant 0 : i32
    %2 = arith.cmpi ne, %1, %c0_i32_0 : i32
    scf.if %2 {
      %cst_29 = arith.constant 0.000000e+00 : f32
      %55 = vector.broadcast %cst_29 : f32 to vector<8x128xf32>
      %c0_30 = arith.constant 0 : index
      %c0_31 = arith.constant 0 : index
      %56 = vector.load %arg4[%c0_30, %c0_31] : memref<8x128xf32, #tpu.memory_space<vmem>>, vector<8x128xf32>
      tpu.vector_store %arg4[%c0_30, %c0_31], %55 {strides = array<i32>} : memref<8x128xf32, #tpu.memory_space<vmem>>, vector<8x128xf32>,
      %cst_32 = arith.constant 0.000000e+00 : f32
      %57 = vector.broadcast %cst_32 : f32 to vector<8x128xf32>
      %c0_33 = arith.constant 0 : index
      %c0_34 = arith.constant 0 : index
      %58 = vector.load %arg5[%c0_33, %c0_34] : memref<8x128xf32, #tpu.memory_space<vmem>>, vector<8x128xf32>
      tpu.vector_store %arg5[%c0_33, %c0_34], %57 {strides = array<i32>} : memref<8x128xf32, #tpu.memory_space<vmem>>, vector<8x128xf32>,
      %cst_35 = arith.constant 0.000000e+00 : f32
      %59 = vector.broadcast %cst_35 : f32 to vector<8x128xf32>
      %c0_36 = arith.constant 0 : index
      %c0_37 = arith.constant 0 : index
      %60 = vector.load %arg6[%c0_36, %c0_37] : memref<8x128xf32, #tpu.memory_space<vmem>>, vector<8x128xf32>
      tpu.vector_store %arg6[%c0_36, %c0_37], %59 {strides = array<i32>} : memref<8x128xf32, #tpu.memory_space<vmem>>, vector<8x128xf32>,
      %cst_38 = arith.constant 0.000000e+00 : f32
      %61 = vector.broadcast %cst_38 : f32 to vector<8x128xf32>
      %c0_39 = arith.constant 0 : index
      %c0_40 = arith.constant 0 : index
      %62 = vector.load %arg7[%c0_39, %c0_40] : memref<8x128xf32, #tpu.memory_space<vmem>>, vector<8x128xf32>
      tpu.vector_store %arg7[%c0_39, %c0_40], %61 {strides = array<i32>} : memref<8x128xf32, #tpu.memory_space<vmem>>, vector<8x128xf32>,
    } else {
    }
    %c0 = arith.constant 0 : index
    %c0_1 = arith.constant 0 : index
    %c0_2 = arith.constant 0 : index
    %3 = vector.load %arg1[%c0, %c0_1, %c0_2] : memref<2x8x128xf32, #tpu.memory_space<vmem>>, vector<1x8x128xf32>
    %4 = vector.shape_cast %3 : vector<1x8x128xf32> to vector<8x128xf32>
    %c1 = arith.constant 1 : index
    %c0_3 = arith.constant 0 : index
    %c0_4 = arith.constant 0 : index
    %5 = vector.load %arg1[%c1, %c0_3, %c0_4] : memref<2x8x128xf32, #tpu.memory_space<vmem>>, vector<1x8x128xf32>
    %6 = vector.shape_cast %5 : vector<1x8x128xf32> to vector<8x128xf32>
    %c0_5 = arith.constant 0 : index
    %c0_6 = arith.constant 0 : index
    %7 = vector.load %arg2[%c0_5, %c0_6] : memref<8x128xi32, #tpu.memory_space<vmem>>, vector<8x128xi32>
    %8 = arith.sitofp %7 : vector<8x128xi32> to vector<8x128xf32>
    %9 = arith.subf %6, %4 : vector<8x128xf32>
    %10 = math.absf %9 : vector<8x128xf32>
    %cst = arith.constant 0.000000e+00 : f32
    %11 = vector.broadcast %cst : f32 to vector<8x128xf32>
    %12 = arith.subf %11, %10 : vector<8x128xf32>
    %13 = math.exp %12 : vector<8x128xf32>
    %cst_7 = arith.constant 1.000000e+00 : f32
    %14 = vector.broadcast %cst_7 : f32 to vector<8x128xf32>
    %15 = arith.addf %14, %13 : vector<8x128xf32>
    %cst_8 = arith.constant 1.000000e+00 : f32
    %16 = vector.broadcast %cst_8 : f32 to vector<8x128xf32>
    %17 = arith.divf %16, %15 : vector<8x128xf32>
    %cst_9 = arith.constant 0.000000e+00 : f32
    %18 = vector.broadcast %cst_9 : f32 to vector<8x128xf32>
    %19 = arith.cmpf oge, %9, %18 : vector<8x128xf32>
    %20 = arith.mulf %13, %17 : vector<8x128xf32>
    %21 = arith.select %19, %17, %20 : vector<8x128xi1>, vector<8x128xf32>
    %22 = tpu.iota {dimensions = array<i32: 0>} : vector<8x128xi32>
    %23 = tpu.iota {dimensions = array<i32: 1>} : vector<8x128xi32>
    %c8_i32 = arith.constant 8 : i32
    %24 = arith.muli %arg0, %c8_i32 : i32
    %25 = vector.broadcast %24 : i32 to vector<8x128xi32>
    %26 = arith.addi %25, %22 : vector<8x128xi32>
    %c128_i32 = arith.constant 128 : i32
    %27 = vector.broadcast %c128_i32 : i32 to vector<8x128xi32>
    %28 = arith.muli %26, %27 : vector<8x128xi32>
    %29 = arith.addi %28, %23 : vector<8x128xi32>
    %c8_i32_10 = arith.constant 8 : i32
    %30 = vector.broadcast %c8_i32_10 : i32 to vector<8x128xi32>
    %31 = arith.cmpi slt, %29, %30 : vector<8x128xi32>
    %32 = arith.extui %31 : vector<8x128xi1> to vector<8x128xi32>
    %33 = arith.sitofp %32 : vector<8x128xi32> to vector<8x128xf32>
    %34 = arith.mulf %33, %8 : vector<8x128xf32>
    %35 = arith.subf %33, %34 : vector<8x128xf32>
    %36 = arith.mulf %34, %21 : vector<8x128xf32>
    %37 = arith.subf %34, %36 : vector<8x128xf32>
    %38 = arith.mulf %35, %21 : vector<8x128xf32>
    %39 = arith.subf %35, %38 : vector<8x128xf32>
    %c0_11 = arith.constant 0 : index
    %c0_12 = arith.constant 0 : index
    %40 = vector.load %arg4[%c0_11, %c0_12] : memref<8x128xf32, #tpu.memory_space<vmem>>, vector<8x128xf32>
    %41 = arith.addf %40, %36 : vector<8x128xf32>
    %c0_13 = arith.constant 0 : index
    %c0_14 = arith.constant 0 : index
    %42 = vector.load %arg4[%c0_13, %c0_14] : memref<8x128xf32, #tpu.memory_space<vmem>>, vector<8x128xf32>
    tpu.vector_store %arg4[%c0_13, %c0_14], %41 {strides = array<i32>} : memref<8x128xf32, #tpu.memory_space<vmem>>, vector<8x128xf32>,
    %c0_15 = arith.constant 0 : index
    %c0_16 = arith.constant 0 : index
    %43 = vector.load %arg5[%c0_15, %c0_16] : memref<8x128xf32, #tpu.memory_space<vmem>>, vector<8x128xf32>
    %44 = arith.addf %43, %39 : vector<8x128xf32>
    %c0_17 = arith.constant 0 : index
    %c0_18 = arith.constant 0 : index
    %45 = vector.load %arg5[%c0_17, %c0_18] : memref<8x128xf32, #tpu.memory_space<vmem>>, vector<8x128xf32>
    tpu.vector_store %arg5[%c0_17, %c0_18], %44 {strides = array<i32>} : memref<8x128xf32, #tpu.memory_space<vmem>>, vector<8x128xf32>,
    %c0_19 = arith.constant 0 : index
    %c0_20 = arith.constant 0 : index
    %46 = vector.load %arg6[%c0_19, %c0_20] : memref<8x128xf32, #tpu.memory_space<vmem>>, vector<8x128xf32>
    %47 = arith.addf %46, %38 : vector<8x128xf32>
    %c0_21 = arith.constant 0 : index
    %c0_22 = arith.constant 0 : index
    %48 = vector.load %arg6[%c0_21, %c0_22] : memref<8x128xf32, #tpu.memory_space<vmem>>, vector<8x128xf32>
    tpu.vector_store %arg6[%c0_21, %c0_22], %47 {strides = array<i32>} : memref<8x128xf32, #tpu.memory_space<vmem>>, vector<8x128xf32>,
    %c0_23 = arith.constant 0 : index
    %c0_24 = arith.constant 0 : index
    %49 = vector.load %arg7[%c0_23, %c0_24] : memref<8x128xf32, #tpu.memory_space<vmem>>, vector<8x128xf32>
    %50 = arith.addf %49, %37 : vector<8x128xf32>
    %c0_25 = arith.constant 0 : index
    %c0_26 = arith.constant 0 : index
    %51 = vector.load %arg7[%c0_25, %c0_26] : memref<8x128xf32, #tpu.memory_space<vmem>>, vector<8x128xf32>
    tpu.vector_store %arg7[%c0_25, %c0_26], %50 {strides = array<i32>} : memref<8x128xf32, #tpu.memory_space<vmem>>, vector<8x128xf32>,
    %c0_i32_27 = arith.constant 0 : i32
    %52 = arith.cmpi eq, %arg0, %c0_i32_27 : i32
    %53 = arith.extui %52 : i1 to i32
    %c0_i32_28 = arith.constant 0 : i32
    %54 = arith.cmpi ne, %53, %c0_i32_28 : i32
    scf.if %54 {
      %c0_29 = arith.constant 0 : index
      %c0_30 = arith.constant 0 : index
      %55 = vector.load %arg4[%c0_29, %c0_30] : memref<8x128xf32, #tpu.memory_space<vmem>>, vector<8x128xf32>
      %cst_31 = arith.constant dense<0.000000e+00> : vector<8xf32>
      %56 = vector.multi_reduction <add>, %55, %cst_31 [1] : vector<8x128xf32> to vector<8xf32>
      %57 = vector.shape_cast %56 : vector<8xf32> to vector<8x1xf32>
      %cst_32 = arith.constant dense<0.000000e+00> : vector<1xf32>
      %58 = vector.multi_reduction <add>, %57, %cst_32 [0] : vector<8x1xf32> to vector<1xf32>
      %59 = vector.shape_cast %58 : vector<1xf32> to vector<1x1xf32>
      %c0_33 = arith.constant 0 : index
      %c0_34 = arith.constant 0 : index
      %60 = vector.load %arg5[%c0_33, %c0_34] : memref<8x128xf32, #tpu.memory_space<vmem>>, vector<8x128xf32>
      %cst_35 = arith.constant dense<0.000000e+00> : vector<8xf32>
      %61 = vector.multi_reduction <add>, %60, %cst_35 [1] : vector<8x128xf32> to vector<8xf32>
      %62 = vector.shape_cast %61 : vector<8xf32> to vector<8x1xf32>
      %cst_36 = arith.constant dense<0.000000e+00> : vector<1xf32>
      %63 = vector.multi_reduction <add>, %62, %cst_36 [0] : vector<8x1xf32> to vector<1xf32>
      %64 = vector.shape_cast %63 : vector<1xf32> to vector<1x1xf32>
      %c0_37 = arith.constant 0 : index
      %c0_38 = arith.constant 0 : index
      %65 = vector.load %arg6[%c0_37, %c0_38] : memref<8x128xf32, #tpu.memory_space<vmem>>, vector<8x128xf32>
      %cst_39 = arith.constant dense<0.000000e+00> : vector<8xf32>
      %66 = vector.multi_reduction <add>, %65, %cst_39 [1] : vector<8x128xf32> to vector<8xf32>
      %67 = vector.shape_cast %66 : vector<8xf32> to vector<8x1xf32>
      %cst_40 = arith.constant dense<0.000000e+00> : vector<1xf32>
      %68 = vector.multi_reduction <add>, %67, %cst_40 [0] : vector<8x1xf32> to vector<1xf32>
      %69 = vector.shape_cast %68 : vector<1xf32> to vector<1x1xf32>
      %c0_41 = arith.constant 0 : index
      %c0_42 = arith.constant 0 : index
      %70 = vector.load %arg7[%c0_41, %c0_42] : memref<8x128xf32, #tpu.memory_space<vmem>>, vector<8x128xf32>
      %cst_43 = arith.constant dense<0.000000e+00> : vector<8xf32>
      %71 = vector.multi_reduction <add>, %70, %cst_43 [1] : vector<8x128xf32> to vector<8xf32>
      %72 = vector.shape_cast %71 : vector<8xf32> to vector<8x1xf32>
      %cst_44 = arith.constant dense<0.000000e+00> : vector<1xf32>
      %73 = vector.multi_reduction <add>, %72, %cst_44 [0] : vector<8x1xf32> to vector<1xf32>
      %74 = vector.shape_cast %73 : vector<1xf32> to vector<1x1xf32>
      %75 = arith.addf %59, %69 : vector<1x1xf32>
      %cst_45 = arith.constant 1.000000e-07 : f32
      %76 = vector.broadcast %cst_45 : f32 to vector<1x1xf32>
      %77 = arith.addf %75, %76 : vector<1x1xf32>
      %78 = arith.divf %59, %77 : vector<1x1xf32>
      %79 = arith.addf %59, %74 : vector<1x1xf32>
      %cst_46 = arith.constant 1.000000e-07 : f32
      %80 = vector.broadcast %cst_46 : f32 to vector<1x1xf32>
      %81 = arith.addf %79, %80 : vector<1x1xf32>
      %82 = arith.divf %59, %81 : vector<1x1xf32>
      %83 = arith.addf %64, %74 : vector<1x1xf32>
      %cst_47 = arith.constant 1.000000e-07 : f32
      %84 = vector.broadcast %cst_47 : f32 to vector<1x1xf32>
      %85 = arith.addf %83, %84 : vector<1x1xf32>
      %86 = arith.divf %64, %85 : vector<1x1xf32>
      %87 = arith.addf %64, %69 : vector<1x1xf32>
      %cst_48 = arith.constant 1.000000e-07 : f32
      %88 = vector.broadcast %cst_48 : f32 to vector<1x1xf32>
      %89 = arith.addf %87, %88 : vector<1x1xf32>
      %90 = arith.divf %64, %89 : vector<1x1xf32>
      %91 = arith.mulf %78, %82 : vector<1x1xf32>
      %cst_49 = arith.constant 2.000000e+00 : f32
      %92 = vector.broadcast %cst_49 : f32 to vector<1x1xf32>
      %93 = arith.mulf %92, %91 : vector<1x1xf32>
      %94 = arith.addf %78, %82 : vector<1x1xf32>
      %cst_50 = arith.constant 1.000000e-07 : f32
      %95 = vector.broadcast %cst_50 : f32 to vector<1x1xf32>
      %96 = arith.addf %94, %95 : vector<1x1xf32>
      %97 = arith.divf %93, %96 : vector<1x1xf32>
      %98 = arith.mulf %86, %90 : vector<1x1xf32>
      %cst_51 = arith.constant 2.000000e+00 : f32
      %99 = vector.broadcast %cst_51 : f32 to vector<1x1xf32>
      %100 = arith.mulf %99, %98 : vector<1x1xf32>
      %101 = arith.addf %86, %90 : vector<1x1xf32>
      %cst_52 = arith.constant 1.000000e-07 : f32
      %102 = vector.broadcast %cst_52 : f32 to vector<1x1xf32>
      %103 = arith.addf %101, %102 : vector<1x1xf32>
      %104 = arith.divf %100, %103 : vector<1x1xf32>
      %cst_53 = arith.constant 1.000000e-07 : f32
      %cst_54 = arith.constant 0.99999988 : f32
      %105 = vector.broadcast %cst_53 : f32 to vector<1x1xf32>
      %106 = arith.maximumf %105, %97 : vector<1x1xf32>
      %107 = vector.broadcast %cst_54 : f32 to vector<1x1xf32>
      %108 = arith.minimumf %107, %106 : vector<1x1xf32>
      %cst_55 = arith.constant 1.000000e-07 : f32
      %cst_56 = arith.constant 0.99999988 : f32
      %109 = vector.broadcast %cst_55 : f32 to vector<1x1xf32>
      %110 = arith.maximumf %109, %104 : vector<1x1xf32>
      %111 = vector.broadcast %cst_56 : f32 to vector<1x1xf32>
      %112 = arith.minimumf %111, %110 : vector<1x1xf32>
      %113 = arith.addf %112, %108 : vector<1x1xf32>
      %cst_57 = arith.constant 5.000000e-01 : f32
      %114 = vector.broadcast %cst_57 : f32 to vector<1x1xf32>
      %115 = arith.mulf %114, %113 : vector<1x1xf32>
      %cst_58 = arith.constant 1.000000e+00 : f32
      %116 = vector.broadcast %cst_58 : f32 to vector<1x1xf32>
      %117 = arith.subf %116, %115 : vector<1x1xf32>
      %c0_59 = arith.constant 0 : index
      %c0_60 = arith.constant 0 : index
      %118 = vector.load %arg3[%c0_59, %c0_60] : memref<1x1xf32, #tpu.memory_space<vmem>>, vector<1x1xf32>
      tpu.vector_store %arg3[%c0_59, %c0_60], %117 {strides = array<i32>} : memref<1x1xf32, #tpu.memory_space<vmem>>, vector<1x1xf32>,
    } else {
    }
    return
  }
  func.func @transform_0(%arg0: i32) -> (i32, i32, i32) {
    %c0_i32 = arith.constant 0 : i32
    %c0_i32_0 = arith.constant 0 : i32
    %c0_i32_1 = arith.constant 0 : i32
    return %c0_i32, %arg0, %c0_i32_0 : i32, i32, i32
  }
  func.func @transform_1(%arg0: i32) -> (i32, i32) {
    %c0_i32 = arith.constant 0 : i32
    %c0_i32_0 = arith.constant 0 : i32
    return %arg0, %c0_i32 : i32, i32
  }
  func.func @transform_2(%arg0: i32) -> (i32, i32) {
    %c0_i32 = arith.constant 0 : i32
    %c0_i32_0 = arith.constant 0 : i32
    %c0_i32_1 = arith.constant 0 : i32
    return %c0_i32, %c0_i32_0 : i32, i32
  }
}

</mosaic_0001>

<llo_original>
// kernel: tpu_custom_call.1
$region0: #{tpu_custom_call.1}
  #allocation0 [shape = 'u32[]', space=smem, size = 0x4, offset = 0x4, fixed_abs, tag = 'smem constant byte address 0x4 - core index']
  #allocation1 [shape = 'u32[144,128]{1,0:T(1,128)}', space=vmem, size = 0x12000, scoped, tag = 'internal scratch']
  #allocation2 [shape = 'f32[8,128]{1,0:T(8,128)}', space=vmem, size = 0x1000, scoped, tag = 'scratch operand']
  #allocation3 [shape = 'f32[8,128]{1,0:T(8,128)}', space=vmem, size = 0x1000, scoped, tag = 'scratch operand']
  #allocation4 [shape = 'f32[8,128]{1,0:T(8,128)}', space=vmem, size = 0x1000, scoped, tag = 'scratch operand']
  #allocation5 [shape = 'f32[8,128]{1,0:T(8,128)}', space=vmem, size = 0x1000, scoped, tag = 'scratch operand']
  %s0 = inlined_call_operand.hbm [shape: f32[2,8,128], index: 0, kind: input, shape index: {}]
  %s1 = inlined_call_operand.hbm [shape: s32[8,128], index: 1, kind: input, shape index: {}]
  %s2 = inlined_call_operand.hbm [shape: f32[1,1], index: 2, kind: output, shape index: {}]
  %s3 = sld [smem:[#allocation0]]
  $region34: #{tpu_custom_call.1} parent=0
    _
  %s5 = ssub.s32 1, %s3
  %s6 = scalar_select 0, %s5, %s3
  $region1: #{tpu_custom_call.1} parent=0
    #allocation6 [shape = 'u8[8192]{0}', space=vmem, size = 0x2000, scoped, tag = 'input window, operand 0, single buffered']
    #allocation7 [shape = 's32[1]{0}', space=sflag, size = 0x4, scoped, tag = 'scoped memory for tpu_custom_call.1']
    #allocation8 [shape = 's32[1]{0}', space=sflag, size = 0x4, scoped, tag = 'scoped memory for tpu_custom_call.1']
    #allocation9 [shape = 'u8[4096]{0}', space=vmem, size = 0x1000, scoped, tag = 'input window, operand 1, single buffered']
    #allocation10 [shape = 's32[1]{0}', space=sflag, size = 0x4, scoped, tag = 'scoped memory for tpu_custom_call.1']
    #allocation11 [shape = 'u8[512]{0}', space=vmem, size = 0x400, scoped, tag = 'output window, operand 0, single buffered']
    %7 = vsyncpa [#allocation7], 0
    %8 = vsyncpa [#allocation10], 0
    %9 = vsyncpa [#allocation8], 0
    // Predicated region
    $region2: #{tpu_custom_call.1} parent=1 // pred_check
      _
    $region3: #{tpu_custom_call.1} parent=1 // pred_check_branch
      %11 = sbr.rel (0) target = $region5
    $region4: #{tpu_custom_call.1} parent=1 // pred_region
      %s13 = ssub.s32 256, 256
      %14 = vsyncadd [#allocation7], %s13
      %s15 = sshll.u32 [#allocation6], 4
      %s16 = int_to_ptr.vmem [resolvable:$true] %s15
      %21 = dma.hbm_to_vmem [thread:$0]  %s0, 256, %s16, [#allocation7], 128, 128, 8
    $region5: #{tpu_custom_call.1} parent=1 // pred_fallthru
      _
    // Predicated region
    $region6: #{tpu_custom_call.1} parent=1 // pred_check
      _
    $region7: #{tpu_custom_call.1} parent=1 // pred_check_branch
      %23 = sbr.rel (0) target = $region9
    $region8: #{tpu_custom_call.1} parent=1 // pred_region
      %s25 = ssub.s32 128, 128
      %26 = vsyncadd [#allocation10], %s25
      %s28 = sshll.u32 [#allocation9], 4
      %s29 = int_to_ptr.vmem [resolvable:$true] %s28
      %31 = dma.hbm_to_vmem [thread:$0]  %s1, 128, %s29, [#allocation10]
    $region9: #{tpu_custom_call.1} parent=1 // pred_fallthru
      _
    // Predicated region
    $region10: #{tpu_custom_call.1} parent=1 // pred_check
      _
    $region11: #{tpu_custom_call.1} parent=1 // pred_check_branch
      %33 = sbr.rel (0) target = $region13
    $region12: #{tpu_custom_call.1} parent=1 // pred_region
      %34 = dma.done [#allocation7], 256
    $region13: #{tpu_custom_call.1} parent=1 // pred_fallthru
      _
    // Predicated region
    $region14: #{tpu_custom_call.1} parent=1 // pred_check
      _
    $region15: #{tpu_custom_call.1} parent=1 // pred_check_branch
      %36 = sbr.rel (0) target = $region17
    $region16: #{tpu_custom_call.1} parent=1 // pred_region
      %37 = dma.done [#allocation10], 128
    $region17: #{tpu_custom_call.1} parent=1 // pred_fallthru
      _
    %p38 = scmp.eq.s32.totalorder 0, 0
    // Predicated region
    $region18: #{tpu_custom_call.1} parent=1 // pred_check
      %p39 = pneg %p38
    $region19: #{tpu_custom_call.1} parent=1 // pred_check_branch
      %41 = sbr.rel (%p39) target = $region21
    $region20: #{tpu_custom_call.1} parent=1 // pred_region
      %42 = vst [vmem:[#allocation2] sm:$0xff] 0.0
      %43 = vst [vmem:[#allocation3] sm:$0xff] 0.0
      %44 = vst [vmem:[#allocation4] sm:$0xff] 0.0
      %45 = vst [vmem:[#allocation5] sm:$0xff] 0.0
    $region21: #{tpu_custom_call.1} parent=1 // pred_fallthru
      _
    %v46 = vld [vmem:[#allocation6] sm:$0xff]
    %s47 = scalar_lea.vmem [#allocation6], 8
    %v48 = vld [vmem:[%s47] sm:$0xff]
    %v49 = vld [vmem:[#allocation9] sm:$0xff]
    %v50 = vcvt.s32.f32 %v49
    %v51 = vsub.f32 %v48, %v46
    %v52 = vand.u32 2147483647, %v51
    %v53 = vsub.f32 0.0, %v52
    %v54 = vmul.f32 %v53, 1.442695
    %v55 = vpow.pop %v54
    %v56 = vadd.f32 %v55, 1.0
    %v57 = vrcp.pop %v56
    %v58 = vmul.f32 1.0, %v57
    %vm59 = vcmp.ge.f32.partialorder %v51, 0.0
    %v60 = vmul.f32 %v55, %v58
    %v61 = vsel %vm59, %v58, %v60
    %v62 = vlaneseq
    %v63 = vshrl.u32 %v62, 7
    %v64 = vlaneseq
    %v65 = vand.u32 %v64, 127
    %s66 = smul.u32 0, 8
    %v67 = vstv %s66
    %v68 = vadd.s32 %v67, %v63
    %v69 = vmul.u32 %v68, 128
    %v70 = vadd.s32 %v69, %v65
    %vm71 = vcmp.lt.s32.totalorder %v70, 8
    %v72 = vsel %vm71, 1, 0
    %v73 = vcvt.s32.f32 %v72
    %v74 = vmul.f32 %v73, %v50
    %v75 = vsub.f32 %v73, %v74
    %v76 = vmul.f32 %v74, %v61
    %v77 = vsub.f32 %v74, %v76
    %v78 = vmul.f32 %v75, %v61
    %v79 = vsub.f32 %v75, %v78
    %v80 = vld [vmem:[#allocation2] sm:$0xff]
    %v81 = vadd.f32 %v80, %v76
    %82 = vst [vmem:[#allocation2] sm:$0xff] %v81
    %v83 = vld [vmem:[#allocation3] sm:$0xff]
    %v84 = vadd.f32 %v83, %v79
    %85 = vst [vmem:[#allocation3] sm:$0xff] %v84
    %v86 = vld [vmem:[#allocation4] sm:$0xff]
    %v87 = vadd.f32 %v86, %v78
    %88 = vst [vmem:[#allocation4] sm:$0xff] %v87
    %v89 = vld [vmem:[#allocation5] sm:$0xff]
    %v90 = vadd.f32 %v89, %v77
    %91 = vst [vmem:[#allocation5] sm:$0xff] %v90
    // Predicated region
    $region22: #{tpu_custom_call.1} parent=1 // pred_check
      %p92 = pneg %p38
    $region23: #{tpu_custom_call.1} parent=1 // pred_check_branch
      %94 = sbr.rel (%p92) target = $region25
    $region24: #{tpu_custom_call.1} parent=1 // pred_region
      %v95 = vld [vmem:[#allocation2] sm:$0xff]
      %96 = vadd.xlane.f32.xlu0 %v95
      %v97 = vpop.xlane.xlu0 %96
      %v98 = vrot.slane %v97, 4
      %v99 = vadd.f32 %v97, %v98
      %v100 = vrot.slane %v99, 2
      %v101 = vadd.f32 %v99, %v100
      %v102 = vrot.slane %v101, 1
      %v103 = vadd.f32 %v101, %v102
      %v104 = vld [vmem:[#allocation3] sm:$0xff]
      %105 = vadd.xlane.f32.xlu0 %v104
      %v106 = vpop.xlane.xlu0 %105
      %v107 = vrot.slane %v106, 4
      %v108 = vadd.f32 %v106, %v107
      %v109 = vrot.slane %v108, 2
      %v110 = vadd.f32 %v108, %v109
      %v111 = vrot.slane %v110, 1
      %v112 = vadd.f32 %v110, %v111
      %v113 = vld [vmem:[#allocation4] sm:$0xff]
      %114 = vadd.xlane.f32.xlu0 %v113
      %v115 = vpop.xlane.xlu0 %114
      %v116 = vrot.slane %v115, 4
      %v117 = vadd.f32 %v115, %v116
      %v118 = vrot.slane %v117, 2
      %v119 = vadd.f32 %v117, %v118
      %v120 = vrot.slane %v119, 1
      %v121 = vadd.f32 %v119, %v120
      %v122 = vld [vmem:[#allocation5] sm:$0xff]
      %123 = vadd.xlane.f32.xlu0 %v122
      %v124 = vpop.xlane.xlu0 %123
      %v125 = vrot.slane %v124, 4
      %v126 = vadd.f32 %v124, %v125
      %v127 = vrot.slane %v126, 2
      %v128 = vadd.f32 %v126, %v127
      %v129 = vrot.slane %v128, 1
      %v130 = vadd.f32 %v128, %v129
      %v131 = vadd.f32 %v103, %v121
      %v132 = vadd.f32 %v131, 1e-07
      %v133 = vrcp.pop %v132
      %v134 = vmul.f32 %v103, %v133
      %v135 = vadd.f32 %v103, %v130
      %v136 = vadd.f32 %v135, 1e-07
      %v137 = vrcp.pop %v136
      %v138 = vmul.f32 %v103, %v137
      %v139 = vadd.f32 %v112, %v130
      %v140 = vadd.f32 %v139, 1e-07
      %v141 = vrcp.pop %v140
      %v142 = vmul.f32 %v112, %v141
      %v143 = vadd.f32 %v112, %v121
      %v144 = vadd.f32 %v143, 1e-07
      %v145 = vrcp.pop %v144
      %v146 = vmul.f32 %v112, %v145
      %v147 = vmul.f32 %v134, %v138
      %v148 = vmul.f32 %v147, 2.0
      %v149 = vadd.f32 %v134, %v138
      %v150 = vadd.f32 %v149, 1e-07
      %v151 = vrcp.pop %v150
      %v152 = vmul.f32 %v148, %v151
      %v153 = vmul.f32 %v142, %v146
      %v154 = vmul.f32 %v153, 2.0
      %v155 = vadd.f32 %v142, %v146
      %v156 = vadd.f32 %v155, 1e-07
      %v157 = vrcp.pop %v156
      %v158 = vmul.f32 %v154, %v157
      %v159 = vmax.f32 %v152, 1e-07
      %v160 = vmin.f32 %v159, 0.9999999
      %v161 = vmax.f32 %v158, 1e-07
      %v162 = vmin.f32 %v161, 0.9999999
      %v163 = vadd.f32 %v162, %v160
      %v164 = vmul.f32 %v163, 0.5
      %v165 = vsub.f32 1.0, %v164
      %vm166 = vcmask 0
      %167 = vst.msk [vmem:[#allocation11] sm:$0x1] %vm166, %v165
    $region25: #{tpu_custom_call.1} parent=1 // pred_fallthru
      _
    // Predicated region
    $region26: #{tpu_custom_call.1} parent=1 // pred_check
      _
    $region27: #{tpu_custom_call.1} parent=1 // pred_check_branch
      %169 = sbr.rel (0) target = $region29
    $region28: #{tpu_custom_call.1} parent=1 // pred_region
      %s171 = ssub.s32 16, 16
      %172 = vsyncadd [#allocation8], %s171
      %s174 = sshll.u32 [#allocation11], 4
      %s175 = int_to_ptr.vmem [resolvable:$true] %s174
      %177 = dma.vmem_to_hbm [thread:$0]  %s175, 16, %s2, [#allocation8]
    $region29: #{tpu_custom_call.1} parent=1 // pred_fallthru
      _
    // Predicated region
    $region30: #{tpu_custom_call.1} parent=1 // pred_check
      _
    $region31: #{tpu_custom_call.1} parent=1 // pred_check_branch
      %179 = sbr.rel (0) target = $region33
    $region32: #{tpu_custom_call.1} parent=1 // pred_region
      %180 = dma.done [#allocation8], 16
    $region33: #{tpu_custom_call.1} parent=1 // pred_fallthru
      _
    %181 = vsyncpa [#allocation7], 1
    %182 = vsyncpa [#allocation10], 1
    %183 = vsyncpa [#allocation8], 1

</llo_original>
